<compile_context>
chip_gen: v5e
topology: v5e:2x2
jax: 0.10.0
libtpu: 0.0.40
codegen_flags: <defaults>
</compile_context>

<pallas_src>
import numpy as np
import jax
import jax.numpy as jnp
from jax import lax
from jax.experimental import pallas as pl
from jax.experimental.pallas import tpu as pltpu

LANE = 128
TR_MAX = 4096           # rows per K tile  -> 4096*128*4B = 2 MiB f32 per input block
PACK_ROW_BUDGET = 4096  # row budget when packing several small samples per step


def _largest_divisor_leq(n, cap):
    """Largest divisor of n that is <= cap (>= 1)."""
    cap = max(1, min(n, cap))
    for d in range(cap, 0, -1):
        if n % d == 0:
            return d
    return 1


def _make_iou_kernel(smooth, R, TR, needs_row_mask):
    smooth = float(smooth)

    def iou_kernel(inp_ref, tar_ref, out_ref, int_acc, tot_acc):
        k = pl.program_id(1)
        nk = pl.num_programs(1)

        # Reset per-sample accumulators at the start of each sample block.
        @pl.when(k == 0)
        def _init():
            int_acc[...] = jnp.zeros_like(int_acc)
            tot_acc[...] = jnp.zeros_like(tot_acc)

        inp = inp_ref[...].astype(jnp.float32)   # (Bt, TR, LANE)
        tar = tar_ref[...].astype(jnp.float32)   # (Bt, TR, LANE)

        def accumulate(i, t):
            # Per-sample, per-lane partial sums, accumulated across K tiles.
            int_acc[...] += jnp.sum(i * t, axis=1)   # (Bt, LANE)
            tot_acc[...] += jnp.sum(i + t, axis=1)   # (Bt, LANE)

        if not needs_row_mask:
            accumulate(inp, tar)
        else:
            # Only the final K tile can over-run past R rows -> pay for the
            # iota/compare/select mask only on that step.
            @pl.when(k < nk - 1)
            def _bulk():
                accumulate(inp, tar)

            @pl.when(k == nk - 1)
            def _tail():
                rows = k * TR + lax.broadcasted_iota(jnp.int32, inp.shape, 1)
                valid = rows < R
                accumulate(jnp.where(valid, inp, 0.0),
                           jnp.where(valid, tar, 0.0))

        # Finalize: cross-lane reduce + IoU once per sample block.
        @pl.when(k == nk - 1)
        def _finalize():
            intersection = jnp.sum(int_acc[...], axis=-1, keepdims=True)  # (Bt, 1)
            total = jnp.sum(tot_acc[...], axis=-1, keepdims=True)         # (Bt, 1)
            union = total - intersection
            iou = (intersection + smooth) / (union + smooth)
            loss = 1.0 - iou                                              # (Bt, 1)
            out_ref[...] = jnp.broadcast_to(loss[:, :, None], out_ref.shape)

    return iou_kernel


def iou_loss_pallas(inputs, targets, smooth=1.0):
    """IoU loss matching the PyTorch IoULoss.forward semantics.

    inputs, targets: (N, C, H, W) arrays (any float dtype). Returns f32 scalar.
    """
    assert inputs.shape == targets.shape
    N = int(inputs.shape[0])
    D = int(np.prod(inputs.shape[1:]))
    itemsize = np.dtype(inputs.dtype).itemsize

    # Flatten each sample; keep native dtype (cast happens inside the kernel).
    inp_flat = inputs.reshape(N, D)
    tar_flat = targets.reshape(N, D)

    # Lane padding only in the uncommon D % 128 != 0 case (zeros don't change
    # the intersection/total sums).  Common CNN shapes take the copy-free path.
    Dp = ((D + LANE - 1) // LANE) * LANE
    if Dp != D:
        pad = ((0, 0), (0, Dp - D))
        inp_flat = jnp.pad(inp_flat, pad)
        tar_flat = jnp.pad(tar_flat, pad)
    R = Dp // LANE

    inp3 = inp_flat.reshape(N, R, LANE)
    tar3 = tar_flat.reshape(N, R, LANE)

    # Tiling: bound VMEM for large samples; pack small samples per grid step.
    if R <= TR_MAX:
        TR = R                                   # full sample per K step
        KT = 1
        cap = max(1, PACK_ROW_BUDGET // max(R, 1))
        if N > 1:
            cap = min(cap, -(-N // 2))           # keep >= 2 batch blocks (v7x 2 TCs)
        Bt = _largest_divisor_leq(N, cap)        # Bt | N -> no batch over-run
    else:
        TR = TR_MAX
        KT = -(-R // TR)
        Bt = 1
    NB = N // Bt
    needs_row_mask = (R % TR) != 0

    kernel = _make_iou_kernel(smooth, R, TR, needs_row_mask)

    cost = pl.CostEstimate(
        flops=int(4 * N * D),
        transcendentals=0,
        bytes_accessed=int(2 * N * D * itemsize + N * LANE * 4),
    )

    out = pl.pallas_call(
        kernel,
        out_shape=jax.ShapeDtypeStruct((N, 1, LANE), jnp.float32),
        grid_spec=pltpu.PrefetchScalarGridSpec(
            num_scalar_prefetch=0,
            grid=(NB, KT),
            in_specs=[
                pl.BlockSpec((Bt, TR, LANE), lambda b, k: (b, k, 0)),
                pl.BlockSpec((Bt, TR, LANE), lambda b, k: (b, k, 0)),
            ],
            out_specs=pl.BlockSpec((Bt, 1, LANE), lambda b, k: (b, 0, 0)),
            scratch_shapes=[
                pltpu.VMEM((Bt, LANE), jnp.float32),   # intersection partials
                pltpu.VMEM((Bt, LANE), jnp.float32),   # total partials
            ],
        ),
        compiler_params=pltpu.CompilerParams(
            dimension_semantics=("parallel", "arbitrary"),
        ),
        cost_estimate=cost,
    )(inp3, tar3)

    per_sample_loss = out[:, 0, 0]          # (N,)
    return jnp.mean(per_sample_loss)


def iou_loss_ref(inputs, targets, smooth=1.0):
    """Pure-JAX reference reproducing the PyTorch loop exactly."""
    N = inputs.shape[0]
    loss = 0.0
    for i in range(N):
        inp = inputs[i].reshape(-1).astype(jnp.float32)
        tar = targets[i].reshape(-1).astype(jnp.float32)
        intersection = jnp.sum(inp * tar)
        total = jnp.sum(inp + tar)
        union = total - intersection
        iou = (intersection + smooth) / (union + smooth)
        loss = loss + (1.0 - iou)
    return loss / N


if __name__ == "__main__":
    key = jax.random.PRNGKey(0)
    k1, k2 = jax.random.split(key)

    # Segmentation-style shapes: N=2, C=4, 16x16.
    N, C, H, W = 2, 4, 16, 16
    inputs = jax.nn.sigmoid(jax.random.normal(k1, (N, C, H, W), jnp.float32))
    targets = (jax.random.uniform(k2, (N, C, H, W)) > 0.5).astype(jnp.float32)

    out = jax.block_until_ready(iou_loss_pallas(inputs, targets, smooth=1.0))
    ref = jax.block_until_ready(iou_loss_ref(inputs, targets, smooth=1.0))

    np.testing.assert_allclose(np.asarray(out), np.asarray(ref),
                               rtol=1e-5, atol=1e-5)
    print("KERNEL_OK")
</pallas_src>

<mosaic_0001>
module attributes {stable_mosaic.version = 11 : i64} {
  func.func @iou_kernel(%arg0: i32, %arg1: i32, %arg2: memref<1x8x128xf32, #tpu.memory_space<vmem>>, %arg3: memref<1x8x128xf32, #tpu.memory_space<vmem>>, %arg4: memref<1x1x128xf32, #tpu.memory_space<vmem>>, %arg5: memref<1x128xf32, #tpu.memory_space<vmem>>, %arg6: memref<1x128xf32, #tpu.memory_space<vmem>>) attributes {dimension_semantics = [#tpu.dimension_semantics<parallel>, #tpu.dimension_semantics<arbitrary>], iteration_bounds = array<i64: 2, 1>, scalar_prefetch = 0 : i64, scratch_operands = 2 : i64, tpu.core_type = #tpu.core_type<tc>, window_params = [{transform_indices = @transform_0, window_bounds = array<i64: 1, 8, 128>}, {transform_indices = @transform_1, window_bounds = array<i64: 1, 8, 128>}, {transform_indices = @transform_2, window_bounds = array<i64: 1, 1, 128>}]} {
    %c0_i32 = arith.constant 0 : i32
    %0 = arith.cmpi eq, %arg1, %c0_i32 : i32
    %1 = arith.extui %0 : i1 to i32
    %c0_i32_0 = arith.constant 0 : i32
    %2 = arith.cmpi ne, %1, %c0_i32_0 : i32
    scf.if %2 {
      %cst_17 = arith.constant 0.000000e+00 : f32
      %18 = vector.broadcast %cst_17 : f32 to vector<1x128xf32>
      %c0_18 = arith.constant 0 : index
      %c0_19 = arith.constant 0 : index
      %19 = vector.load %arg5[%c0_18, %c0_19] : memref<1x128xf32, #tpu.memory_space<vmem>>, vector<1x128xf32>
      tpu.vector_store %arg5[%c0_18, %c0_19], %18 {strides = array<i32>} : memref<1x128xf32, #tpu.memory_space<vmem>>, vector<1x128xf32>,
      %cst_20 = arith.constant 0.000000e+00 : f32
      %20 = vector.broadcast %cst_20 : f32 to vector<1x128xf32>
      %c0_21 = arith.constant 0 : index
      %c0_22 = arith.constant 0 : index
      %21 = vector.load %arg6[%c0_21, %c0_22] : memref<1x128xf32, #tpu.memory_space<vmem>>, vector<1x128xf32>
      tpu.vector_store %arg6[%c0_21, %c0_22], %20 {strides = array<i32>} : memref<1x128xf32, #tpu.memory_space<vmem>>, vector<1x128xf32>,
    } else {
    }
    %c0 = arith.constant 0 : index
    %c0_1 = arith.constant 0 : index
    %c0_2 = arith.constant 0 : index
    %3 = vector.load %arg2[%c0, %c0_1, %c0_2] : memref<1x8x128xf32, #tpu.memory_space<vmem>>, vector<1x8x128xf32>
    %c0_3 = arith.constant 0 : index
    %c0_4 = arith.constant 0 : index
    %c0_5 = arith.constant 0 : index
    %4 = vector.load %arg3[%c0_3, %c0_4, %c0_5] : memref<1x8x128xf32, #tpu.memory_space<vmem>>, vector<1x8x128xf32>
    %c0_6 = arith.constant 0 : index
    %c0_7 = arith.constant 0 : index
    %5 = vector.load %arg5[%c0_6, %c0_7] : memref<1x128xf32, #tpu.memory_space<vmem>>, vector<1x128xf32>
    %6 = arith.mulf %3, %4 : vector<1x8x128xf32>
    %cst = arith.constant dense<0.000000e+00> : vector<1x128xf32>
    %7 = vector.multi_reduction <add>, %6, %cst [1] : vector<1x8x128xf32> to vector<1x128xf32>
    %8 = arith.addf %5, %7 : vector<1x128xf32>
    %c0_8 = arith.constant 0 : index
    %c0_9 = arith.constant 0 : index
    %9 = vector.load %arg5[%c0_8, %c0_9] : memref<1x128xf32, #tpu.memory_space<vmem>>, vector<1x128xf32>
    tpu.vector_store %arg5[%c0_8, %c0_9], %8 {strides = array<i32>} : memref<1x128xf32, #tpu.memory_space<vmem>>, vector<1x128xf32>,
    %c0_10 = arith.constant 0 : index
    %c0_11 = arith.constant 0 : index
    %10 = vector.load %arg6[%c0_10, %c0_11] : memref<1x128xf32, #tpu.memory_space<vmem>>, vector<1x128xf32>
    %11 = arith.addf %3, %4 : vector<1x8x128xf32>
    %cst_12 = arith.constant dense<0.000000e+00> : vector<1x128xf32>
    %12 = vector.multi_reduction <add>, %11, %cst_12 [1] : vector<1x8x128xf32> to vector<1x128xf32>
    %13 = arith.addf %10, %12 : vector<1x128xf32>
    %c0_13 = arith.constant 0 : index
    %c0_14 = arith.constant 0 : index
    %14 = vector.load %arg6[%c0_13, %c0_14] : memref<1x128xf32, #tpu.memory_space<vmem>>, vector<1x128xf32>
    tpu.vector_store %arg6[%c0_13, %c0_14], %13 {strides = array<i32>} : memref<1x128xf32, #tpu.memory_space<vmem>>, vector<1x128xf32>,
    %c0_i32_15 = arith.constant 0 : i32
    %15 = arith.cmpi eq, %arg1, %c0_i32_15 : i32
    %16 = arith.extui %15 : i1 to i32
    %c0_i32_16 = arith.constant 0 : i32
    %17 = arith.cmpi ne, %16, %c0_i32_16 : i32
    scf.if %17 {
      %c0_17 = arith.constant 0 : index
      %c0_18 = arith.constant 0 : index
      %18 = vector.load %arg5[%c0_17, %c0_18] : memref<1x128xf32, #tpu.memory_space<vmem>>, vector<1x128xf32>
      %cst_19 = arith.constant dense<0.000000e+00> : vector<1xf32>
      %19 = vector.multi_reduction <add>, %18, %cst_19 [1] : vector<1x128xf32> to vector<1xf32>
      %20 = vector.shape_cast %19 : vector<1xf32> to vector<1x1xf32>
      %c0_20 = arith.constant 0 : index
      %c0_21 = arith.constant 0 : index
      %21 = vector.load %arg6[%c0_20, %c0_21] : memref<1x128xf32, #tpu.memory_space<vmem>>, vector<1x128xf32>
      %cst_22 = arith.constant dense<0.000000e+00> : vector<1xf32>
      %22 = vector.multi_reduction <add>, %21, %cst_22 [1] : vector<1x128xf32> to vector<1xf32>
      %23 = vector.shape_cast %22 : vector<1xf32> to vector<1x1xf32>
      %24 = arith.subf %23, %20 : vector<1x1xf32>
      %cst_23 = arith.constant 1.000000e+00 : f32
      %25 = vector.broadcast %cst_23 : f32 to vector<1x1xf32>
      %26 = arith.addf %20, %25 : vector<1x1xf32>
      %cst_24 = arith.constant 1.000000e+00 : f32
      %27 = vector.broadcast %cst_24 : f32 to vector<1x1xf32>
      %28 = arith.addf %24, %27 : vector<1x1xf32>
      %29 = arith.divf %26, %28 : vector<1x1xf32>
      %cst_25 = arith.constant 1.000000e+00 : f32
      %30 = vector.broadcast %cst_25 : f32 to vector<1x1xf32>
      %31 = arith.subf %30, %29 : vector<1x1xf32>
      %32 = vector.shape_cast %31 : vector<1x1xf32> to vector<1x1x1xf32>
      %33 = vector.shape_cast %32 : vector<1x1x1xf32> to vector<1x1x1xf32>
      %34 = vector.broadcast %33 : vector<1x1x1xf32> to vector<1x1x128xf32>
      %c0_26 = arith.constant 0 : index
      %c0_27 = arith.constant 0 : index
      %c0_28 = arith.constant 0 : index
      %35 = vector.load %arg4[%c0_26, %c0_27, %c0_28] : memref<1x1x128xf32, #tpu.memory_space<vmem>>, vector<1x1x128xf32>
      tpu.vector_store %arg4[%c0_26, %c0_27, %c0_28], %34 {strides = array<i32>} : memref<1x1x128xf32, #tpu.memory_space<vmem>>, vector<1x1x128xf32>,
    } else {
    }
    return
  }
  func.func @transform_0(%arg0: i32, %arg1: i32) -> (i32, i32, i32) {
    %c0_i32 = arith.constant 0 : i32
    %c0_i32_0 = arith.constant 0 : i32
    return %arg0, %arg1, %c0_i32 : i32, i32, i32
  }
  func.func @transform_1(%arg0: i32, %arg1: i32) -> (i32, i32, i32) {
    %c0_i32 = arith.constant 0 : i32
    %c0_i32_0 = arith.constant 0 : i32
    return %arg0, %arg1, %c0_i32 : i32, i32, i32
  }
  func.func @transform_2(%arg0: i32, %arg1: i32) -> (i32, i32, i32) {
    %c0_i32 = arith.constant 0 : i32
    %c0_i32_0 = arith.constant 0 : i32
    %c0_i32_1 = arith.constant 0 : i32
    return %arg0, %c0_i32, %c0_i32_0 : i32, i32, i32
  }
}

</mosaic_0001>

<llo_original>
// kernel: tpu_custom_call.1
$region0: #{tpu_custom_call.1}
  #allocation0 [shape = 'u32[]', space=smem, size = 0x4, offset = 0x4, fixed_abs, tag = 'smem constant byte address 0x4 - core index']
  #allocation1 [shape = 'u32[72,128]{1,0:T(1,128)}', space=vmem, size = 0x9000, scoped, tag = 'internal scratch']
  #allocation2 [shape = 'f32[1,128]{1,0:T(1,128)}', space=vmem, size = 0x200, scoped, tag = 'scratch operand']
  #allocation3 [shape = 'f32[1,128]{1,0:T(1,128)}', space=vmem, size = 0x200, scoped, tag = 'scratch operand']
  %s0 = inlined_call_operand.hbm [shape: f32[2,8,128], index: 0, kind: input, shape index: {}]
  %s1 = inlined_call_operand.hbm [shape: f32[2,8,128], index: 1, kind: input, shape index: {}]
  %s2 = inlined_call_operand.hbm [shape: f32[2,1,128], index: 2, kind: output, shape index: {}]
  %s3 = sld [smem:[#allocation0]]
  $region57: #{tpu_custom_call.1} parent=0
    _
  %s5 = ssub.s32 1, %s3
  %s6 = scalar_select 0, %s5, %s3
  $region1: #{tpu_custom_call.1} parent=0
    #allocation4 [shape = 'u8[8192]{0}', space=vmem, size = 0x2000, scoped, tag = 'input window, operand 0']
    #allocation5 [shape = 's32[2]{0}', space=sflag, size = 0x8, scoped, tag = 'scoped memory for tpu_custom_call.1']
    #allocation6 [shape = 's32[2]{0}', space=sflag, size = 0x8, scoped, tag = 'scoped memory for tpu_custom_call.1']
    #allocation7 [shape = 'u8[8192]{0}', space=vmem, size = 0x2000, scoped, tag = 'input window, operand 1']
    #allocation8 [shape = 's32[2]{0}', space=sflag, size = 0x8, scoped, tag = 'scoped memory for tpu_custom_call.1']
    #allocation9 [shape = 'u8[1024]{0}', space=vmem, size = 0x400, scoped, tag = 'output window, operand 0']
    %7 = vsyncpa [#allocation5], 0
    %s8 = scalar_lea.sflag [#allocation5], 1
    %9 = vsyncpa %s8, 0
    %10 = vsyncpa [#allocation8], 0
    %s11 = scalar_lea.sflag [#allocation8], 1
    %12 = vsyncpa %s11, 0
    %13 = vsyncpa [#allocation6], 0
    %s14 = scalar_lea.sflag [#allocation6], 1
    %15 = vsyncpa %s14, 0
    loop: start=0, step=1, limit=4
    $region2: #{tpu_custom_call.1} parent=1 // loop_pre_header
      _
    $region3: #{tpu_custom_call.1} parent=1 // loop_header
      %s17 = sphi 0, %s21
      %p18 = scmp.ge.s32.totalorder %s17, 4
      %s24 = sphi 0, %s36
      %s25 = sphi 0, %s32
      %s26 = sphi 0, %s24
      %s27 = sphi 0, %s25
      %s28 = sphi 0, %s26
      %s29 = sphi 0, %s27
      %s41 = sphi 0, %s43
      %s44 = sphi 0, %s41
      %s45 = sphi 0, %s44
      %s61 = sphi 0, %s45
      %s69 = sphi 0, %s71
      %s72 = sphi 0, %s69
      %s73 = sphi 0, %s72
      %s89 = sphi 0, %s73
      %s95 = sphi 0, %s97
      %s98 = sphi 0, %s95
      %s99 = sphi 0, %s98
      %s115 = sphi 0, %s99
    $region4: #{tpu_custom_call.1} parent=1 // loop_header_branch
      %20 = sbr.rel (%p18) target = $region8
    $region5: #{tpu_custom_call.1} parent=1 // loop_body
      %s22 = ssub.s32 %s17, 1
      %s23 = ssub.s32 %s17, 2
      %s30 = sadd.s32 1, %s25
      %p31 = scmp.ge.s32.totalorder %s30, 1
      %s32 = scalar_select %p31, 0, %s30
      %s33 = sadd.s32 1, %s24
      %s34 = scalar_select %p31, %s33, %s24
      %p35 = scmp.ge.s32.totalorder %s34, 2
      %s36 = scalar_select %p35, 0, %s34
      %s37 = ssub.s32 %s24, %s36
      %s38 = ssub.s32 %s25, %s32
      %s39 = sor.u32 %s37, %s38
      %p40 = scmp.eq.s32.totalorder %s39, 0
      %s42 = sadd.s32 %s41, 1
      %s43 = scalar_select %p40, %s41, %s42
      %p46 = pneg %p40
      %p47 = scmp.eq.s32.totalorder %s17, 1
      %p48 = por %p46, %p47
      %p49 = scmp.ne.s32.totalorder %s41, %s44
      %p50 = scmp.eq.s32.totalorder %s17, 0
      %p51 = por %p49, %p50
      %p52 = scmp.ne.s32.totalorder %s41, %s44
      %p53 = scmp.eq.s32.totalorder %s22, 1
      %p54 = por %p52, %p53
      %p55 = scmp.ne.s32.totalorder %s44, %s45
      %p56 = scmp.eq.s32.totalorder %s22, 0
      %p57 = por %p55, %p56
      %p58 = scmp.ne.s32.totalorder %s44, %s45
      %p59 = scmp.eq.s32.totalorder %s23, 1
      %p60 = por %p58, %p59
      %p62 = scmp.ne.s32.totalorder %s45, %s61
      %p63 = scmp.eq.s32.totalorder %s23, 0
      %p64 = por %p62, %p63
      %s65 = ssub.s32 %s24, %s36
      %s66 = ssub.s32 %s25, %s32
      %s67 = sor.u32 %s65, %s66
      %p68 = scmp.eq.s32.totalorder %s67, 0
      %s70 = sadd.s32 %s69, 1
      %s71 = scalar_select %p68, %s69, %s70
      %p74 = pneg %p68
      %p75 = scmp.eq.s32.totalorder %s17, 1
      %p76 = por %p74, %p75
      %p77 = scmp.ne.s32.totalorder %s69, %s72
      %p78 = scmp.eq.s32.totalorder %s17, 0
      %p79 = por %p77, %p78
      %p80 = scmp.ne.s32.totalorder %s69, %s72
      %p81 = scmp.eq.s32.totalorder %s22, 1
      %p82 = por %p80, %p81
      %p83 = scmp.ne.s32.totalorder %s72, %s73
      %p84 = scmp.eq.s32.totalorder %s22, 0
      %p85 = por %p83, %p84
      %p86 = scmp.ne.s32.totalorder %s72, %s73
      %p87 = scmp.eq.s32.totalorder %s23, 1
      %p88 = por %p86, %p87
      %p90 = scmp.ne.s32.totalorder %s73, %s89
      %p91 = scmp.eq.s32.totalorder %s23, 0
      %p92 = por %p90, %p91
      %s93 = ssub.s32 %s24, %s36
      %p94 = scmp.eq.s32.totalorder %s93, 0
      %s96 = sadd.s32 %s95, 1
      %s97 = scalar_select %p94, %s95, %s96
      %p100 = pneg %p94
      %p101 = scmp.eq.s32.totalorder %s17, 1
      %p102 = por %p100, %p101
      %p103 = scmp.ne.s32.totalorder %s95, %s98
      %p104 = scmp.eq.s32.totalorder %s17, 0
      %p105 = por %p103, %p104
      %p106 = scmp.ne.s32.totalorder %s95, %s98
      %p107 = scmp.eq.s32.totalorder %s22, 1
      %p108 = por %p106, %p107
      %p109 = scmp.ne.s32.totalorder %s98, %s99
      %p110 = scmp.eq.s32.totalorder %s22, 0
      %p111 = por %p109, %p110
      %p112 = scmp.ne.s32.totalorder %s98, %s99
      %p113 = scmp.eq.s32.totalorder %s23, 1
      %p114 = por %p112, %p113
      %p116 = scmp.ne.s32.totalorder %s99, %s115
      %p117 = scmp.eq.s32.totalorder %s23, 0
      %p118 = por %p116, %p117
      %p119 = scmp.le.s32.totalorder 1, %s17
      %p120 = scmp.lt.s32.totalorder %s17, 3
      %p121 = pnand %p119, %p120
      %p122 = pneg %p121
      // Predicated region
      $region9: #{tpu_custom_call.1} parent=5 // pred_check
        _
      $region10: #{tpu_custom_call.1} parent=5 // pred_check_branch
        %124 = sbr.rel (%p121) target = $region12
      $region11: #{tpu_custom_call.1} parent=5 // pred_region
        %s125 = ssub.s32 %s17, 1
      $region12: #{tpu_custom_call.1} parent=5 // pred_fallthru
        _
      %p126 = scmp.lt.s32.totalorder %s17, 2
      // Predicated region
      $region13: #{tpu_custom_call.1} parent=5 // pred_check
        %p127 = pneg %p126
      $region14: #{tpu_custom_call.1} parent=5 // pred_check_branch
        %129 = sbr.rel (%p127) target = $region16
      $region15: #{tpu_custom_call.1} parent=5 // pred_region
        // Predicated region
        $region17: #{tpu_custom_call.1} parent=15 // pred_check
          %p130 = pneg %p51
        $region18: #{tpu_custom_call.1} parent=15 // pred_check_branch
          %132 = sbr.rel (%p130) target = $region20
        $region19: #{tpu_custom_call.1} parent=15 // pred_region
          %s133 = sand.u32 %s41, 1
          %s134 = scalar_lea.sflag [#allocation5], %s133
          %s135 = sand.u32 %s41, 1
          %s136 = smul.addr %s135, 8
          %s137 = scalar_lea.vmem [#allocation4], %s136
          %139 = vsyncadd %s134, 0
          %s140 = sadd.s32 %s25, %s24
          %s141 = smul.addr %s140, 8
          %s142 = scalar_lea.hbm %s0, %s141
          %s144 = sshll.u32 %s142, 4
          %s145 = int_to_ptr.hbm [resolvable:$true] %s144
          %s146 = sshll.u32 %s137, 4
          %s147 = int_to_ptr.vmem [resolvable:$true] %s146
          %149 = dma.hbm_to_vmem [thread:$0]  %s145, 128, %s147, %s134
        $region20: #{tpu_custom_call.1} parent=15 // pred_fallthru
          _
        // Predicated region
        $region21: #{tpu_custom_call.1} parent=15 // pred_check
          %p150 = pneg %p79
        $region22: #{tpu_custom_call.1} parent=15 // pred_check_branch
          %152 = sbr.rel (%p150) target = $region24
        $region23: #{tpu_custom_call.1} parent=15 // pred_region
          %s153 = sand.u32 %s69, 1
          %s154 = scalar_lea.sflag [#allocation8], %s153
          %s155 = sand.u32 %s69, 1
          %s156 = smul.addr %s155, 8
          %s157 = scalar_lea.vmem [#allocation7], %s156
          %159 = vsyncadd %s154, 0
          %s160 = sadd.s32 %s25, %s24
          %s161 = smul.addr %s160, 8
          %s162 = scalar_lea.hbm %s1, %s161
          %s164 = sshll.u32 %s162, 4
          %s165 = int_to_ptr.hbm [resolvable:$true] %s164
          %s166 = sshll.u32 %s157, 4
          %s167 = int_to_ptr.vmem [resolvable:$true] %s166
          %169 = dma.hbm_to_vmem [thread:$0]  %s165, 128, %s167, %s154
        $region24: #{tpu_custom_call.1} parent=15 // pred_fallthru
          _
      $region16: #{tpu_custom_call.1} parent=5 // pred_fallthru
        _
      %p170 = scmp.le.s32.totalorder 1, %s17
      %p171 = scmp.lt.s32.totalorder %s17, 3
      %p172 = pnand %p170, %p171
      %p173 = pneg %p172
      // Predicated region
      $region25: #{tpu_custom_call.1} parent=5 // pred_check
        _
      $region26: #{tpu_custom_call.1} parent=5 // pred_check_branch
        %175 = sbr.rel (%p172) target = $region28
      $region27: #{tpu_custom_call.1} parent=5 // pred_region
        %s176 = ssub.s32 %s17, 1
        %s177 = sand.u32 %s44, 1
        %s178 = scalar_lea.sflag [#allocation5], %s177
        %s179 = sand.u32 %s44, 1
        %s180 = smul.addr %s179, 8
        %s181 = scalar_lea.vmem [#allocation4], %s180
        // Predicated region
        $region29: #{tpu_custom_call.1} parent=27 // pred_check
          %p182 = pneg %p57
        $region30: #{tpu_custom_call.1} parent=27 // pred_check_branch
          %184 = sbr.rel (%p182) target = $region32
        $region31: #{tpu_custom_call.1} parent=27 // pred_region
          %186 = dma.done %s178, 128
        $region32: #{tpu_custom_call.1} parent=27 // pred_fallthru
          _
        %s187 = sand.u32 %s72, 1
        %s188 = scalar_lea.sflag [#allocation8], %s187
        %s189 = sand.u32 %s72, 1
        %s190 = smul.addr %s189, 8
        %s191 = scalar_lea.vmem [#allocation7], %s190
        // Predicated region
        $region33: #{tpu_custom_call.1} parent=27 // pred_check
          %p192 = pneg %p85
        $region34: #{tpu_custom_call.1} parent=27 // pred_check_branch
          %194 = sbr.rel (%p192) target = $region36
        $region35: #{tpu_custom_call.1} parent=27 // pred_region
          %196 = dma.done %s188, 128
        $region36: #{tpu_custom_call.1} parent=27 // pred_fallthru
          _
        %s197 = sand.u32 %s44, 1
        %s198 = scalar_lea.sflag [#allocation5], %s197
        %s199 = sand.u32 %s44, 1
        %s200 = smul.addr %s199, 8
        %s201 = scalar_lea.vmem [#allocation4], %s200
        %p202 = pneg %p57
        %p203 = pneg %p54
        %s204 = sand.u32 %s72, 1
        %s205 = scalar_lea.sflag [#allocation8], %s204
        %s206 = sand.u32 %s72, 1
        %s207 = smul.addr %s206, 8
        %s208 = scalar_lea.vmem [#allocation7], %s207
        %p209 = pneg %p85
        %p210 = pneg %p82
        %p211 = pneg %p111
        %p212 = pneg %p108
        %s213 = sand.u32 %s98, 1
        %s214 = scalar_lea.sflag [#allocation6], %s213
        %s215 = sand.u32 %s98, 1
        %s216 = scalar_lea.vmem [#allocation9], %s215
        %p217 = scmp.eq.s32.totalorder %s27, 0
        // Predicated region
        $region37: #{tpu_custom_call.1} parent=27 // pred_check
          %p218 = pneg %p217
        $region38: #{tpu_custom_call.1} parent=27 // pred_check_branch
          %220 = sbr.rel (%p218) target = $region40
        $region39: #{tpu_custom_call.1} parent=27 // pred_region
          %221 = vst [vmem:[#allocation2] sm:$0x1] 0.0
          %222 = vst [vmem:[#allocation3] sm:$0x1] 0.0
        $region40: #{tpu_custom_call.1} parent=27 // pred_fallthru
          _
        %v223 = vld [vmem:[%s181] sm:$0xff]
        %v224 = vld [vmem:[%s191] sm:$0xff]
        %v225 = vld [vmem:[#allocation2] sm:$0x1]
        %v226 = vmul.f32 %v223, %v224
        %v227 = vrot.slane %v226, 4
        %v228 = vadd.f32 %v226, %v227
        %v229 = vrot.slane %v228, 2
        %v230 = vadd.f32 %v228, %v229
        %v231 = vrot.slane %v230, 1
        %v232 = vadd.f32 %v230, %v231
        %v233 = vadd.f32 %v225, %v232
        %234 = vst [vmem:[#allocation2] sm:$0x1] %v233
        %v235 = vld [vmem:[#allocation3] sm:$0x1]
        %v236 = vadd.f32 %v223, %v224
        %v237 = vrot.slane %v236, 4
        %v238 = vadd.f32 %v236, %v237
        %v239 = vrot.slane %v238, 2
        %v240 = vadd.f32 %v238, %v239
        %v241 = vrot.slane %v240, 1
        %v242 = vadd.f32 %v240, %v241
        %v243 = vadd.f32 %v235, %v242
        %244 = vst [vmem:[#allocation3] sm:$0x1] %v243
        // Predicated region
        $region41: #{tpu_custom_call.1} parent=27 // pred_check
          %p245 = pneg %p217
        $region42: #{tpu_custom_call.1} parent=27 // pred_check_branch
          %247 = sbr.rel (%p245) target = $region44
        $region43: #{tpu_custom_call.1} parent=27 // pred_region
          %v248 = vld [vmem:[#allocation2] sm:$0x1]
          %vm249 = vcmask 1040384
          %v250 = vsel %vm249, %v248, 0.0
          %251 = vadd.xlane.f32.xlu0 %v250
          %v252 = vpop.xlane.xlu0 %251
          %v253 = vld [vmem:[#allocation3] sm:$0x1]
          %v254 = vsel %vm249, %v253, 0.0
          %255 = vadd.xlane.f32.xlu0 %v254
          %v256 = vpop.xlane.xlu0 %255
          %v257 = vsub.f32 %v256, %v252
          %v258 = vadd.f32 %v252, 1.0
          %v259 = vadd.f32 %v257, 1.0
          %v260 = vrcp.pop %v259
          %v261 = vmul.f32 %v259, %v260
          %v262 = vsub.f32 1.0, %v261
          %v263 = vmul.f32 %v260, %v262
          %v264 = vadd.f32 %v260, %v263
          %vm265 = vweird.f32 %v259
          %vm266 = vweird.f32 %v260
          %vm267 = vmor %vm265, %vm266
          %v268 = vsel %vm267, %v260, %v264
          %v269 = vand.u32 2147483647, %v259
          %vm270 = vcmp.eq.f32.partialorder %v269, 8.507059e+37
          %v271 = vand.u32 %v259, 2147483648
          %v272 = vor.u32 1.1754944e-38, %v271
          %v273 = vsel %vm270, %v272, %v268
          %v274 = vmul.f32 %v258, %v273
          %v275 = vsub.f32 1.0, %v274
          %276 = vst [vmem:[%s216] sm:$0x1] %v275
        $region44: #{tpu_custom_call.1} parent=27 // pred_fallthru
          _
        %s277 = sand.u32 %s98, 1
        %s278 = scalar_lea.sflag [#allocation6], %s277
        %s279 = sand.u32 %s98, 1
        %s280 = scalar_lea.vmem [#allocation9], %s279
        // Predicated region
        $region45: #{tpu_custom_call.1} parent=27 // pred_check
          %p281 = pneg %p108
        $region46: #{tpu_custom_call.1} parent=27 // pred_check_branch
          %283 = sbr.rel (%p281) target = $region48
        $region47: #{tpu_custom_call.1} parent=27 // pred_region
          %285 = vsyncadd %s278, 0
          %s286 = scalar_lea.hbm %s2, %s26
          %s288 = sshll.u32 %s280, 4
          %s289 = int_to_ptr.vmem [resolvable:$true] %s288
          %s290 = sshll.u32 %s286, 4
          %s291 = int_to_ptr.hbm [resolvable:$true] %s290
          %293 = dma.vmem_to_hbm [thread:$0]  %s289, 16, %s291, %s278
        $region48: #{tpu_custom_call.1} parent=27 // pred_fallthru
          _
      $region28: #{tpu_custom_call.1} parent=5 // pred_fallthru
        _
      %p294 = scmp.le.s32.totalorder 2, %s17
      // Predicated region
      $region49: #{tpu_custom_call.1} parent=5 // pred_check
        %p295 = pneg %p294
      $region50: #{tpu_custom_call.1} parent=5 // pred_check_branch
        %297 = sbr.rel (%p295) target = $region52
      $region51: #{tpu_custom_call.1} parent=5 // pred_region
        %s298 = ssub.s32 %s17, 2
        // Predicated region
        $region53: #{tpu_custom_call.1} parent=51 // pred_check
          %p299 = pneg %p114
        $region54: #{tpu_custom_call.1} parent=51 // pred_check_branch
          %301 = sbr.rel (%p299) target = $region56
        $region55: #{tpu_custom_call.1} parent=51 // pred_region
          %s302 = sand.u32 %s99, 1
          %s303 = scalar_lea.sflag [#allocation6], %s302
          %s304 = sand.u32 %s99, 1
          %s305 = scalar_lea.vmem [#allocation9], %s304
          %307 = dma.done %s303, 16
        $region56: #{tpu_custom_call.1} parent=51 // pred_fallthru
          _
      $region52: #{tpu_custom_call.1} parent=5 // pred_fallthru
        _
    $region6: #{tpu_custom_call.1} parent=1 // loop_footer
      %s21 = sadd.s32 1, %s17
    $region7: #{tpu_custom_call.1} parent=1 // loop_footer_branch
      %16 = sbr.rel target = $region3
    $region8: #{tpu_custom_call.1} parent=1 // loop_exit
      _
    %308 = vsyncpa [#allocation5], 1
    %s309 = scalar_lea.sflag [#allocation5], 1
    %310 = vsyncpa %s309, 1
    %311 = vsyncpa [#allocation8], 1
    %s312 = scalar_lea.sflag [#allocation8], 1
    %313 = vsyncpa %s312, 1
    %314 = vsyncpa [#allocation6], 1
    %s315 = scalar_lea.sflag [#allocation6], 1
    %316 = vsyncpa %s315, 1

</llo_original>
